<compile_context>
chip_gen: v7x
topology: tpu7x:2x2x1
jax: 0.10.0
libtpu: 0.0.40
codegen_flags: <defaults>
</compile_context>

<pallas_src>
from functools import partial

import numpy as np
import jax
import jax.numpy as jnp
from jax.experimental import pallas as pl
from jax.experimental.pallas import tpu as pltpu


def _pool_kernel(x_ref, p_ref, o_ref, *, topk):
    x = x_ref[...]                         # (Bt, N, F) float32
    p_row = p_ref[...]                     # (1, F)     float32, pre-normalized
    bt, n, f = x.shape

    # ---- scores on VPU + XLU (no 1-wide MXU matvec), lane-dense (Bt, N) ----
    s = jnp.sum(x * p_row[None, :, :], axis=-1)                    # (Bt, N) f32

    # ---- iterative top-k (K static); ties resolve to the smallest index ----
    col_ids = jax.lax.broadcasted_iota(jnp.int32, (bt, n), 1)      # (Bt, N)
    k_ids = jax.lax.broadcasted_iota(jnp.int32, (bt, topk), 1)     # (Bt, K)

    def topk_body(i, carry):
        s_c, vals_c, idxs_c = carry
        m = jnp.max(s_c, axis=-1, keepdims=True)                   # (Bt, 1)
        sel = jnp.min(jnp.where(s_c == m, col_ids, n),
                      axis=-1, keepdims=True)                      # (Bt, 1) int32
        vals_c = jnp.where(k_ids == i, m, vals_c)
        idxs_c = jnp.where(k_ids == i, sel, idxs_c)
        s_c = jnp.where(col_ids == sel, -jnp.inf, s_c)
        return s_c, vals_c, idxs_c

    init = (s,
            jnp.zeros((bt, topk), jnp.float32),
            jnp.zeros((bt, topk), jnp.int32))
    _, vals, idxs = jax.lax.fori_loop(0, topk, topk_body, init,
                                      unroll=(topk <= 16))

    # ---- sigmoid on the K selected (already-normalized) scores -------------
    y = jax.nn.sigmoid(vals)                                       # (Bt, K)

    # ---- gather: batched one-hot (Bt,K,N) @ (Bt,N,F) on the MXU ------------
    n_ids = jax.lax.broadcasted_iota(jnp.int32, (bt, topk, n), 2)  # (Bt, K, N)
    one_hot = (n_ids == idxs[..., None]).astype(jnp.float32)       # (Bt, K, N)
    gathered = jnp.einsum('bkn,bnf->bkf', one_hot, x.astype(jnp.float32),
                          preferred_element_type=jnp.float32)      # (Bt, K, F)

    o_ref[...] = (gathered * y[..., None]).astype(o_ref.dtype)


def _per_batch_vmem_bytes(N, F, topk):
    # f32/int32 = 4 bytes. Per batch element, per grid step:
    #   x block (double-buffered)                 : 2 * N * F
    #   out block (double-buffered)               : 2 * K * F
    #   possibly materialized x * p product       : 1 * N * F
    #   one_hot (f32) + n_ids iota (int32)        : 2 * K * N
    #   gathered f32 result                       : 1 * K * F
    #   scores s + col_ids + masked-s carry       : 3 * N
    #   vals / idxs / k_ids / y                   : 4 * K
    return 4 * (3 * N * F + 3 * topk * F + 2 * topk * N + 3 * N + 4 * topk)


def _choose_batch_tile(B, N, F, topk, budget_bytes, min_block_bytes):
    per_b = _per_batch_vmem_bytes(N, F, topk)
    bt = max(1, min(B, budget_bytes // max(per_b, 1)))
    cdiv = lambda a, b: -(-a // b)
    # Keep at least 2 grid steps when possible (pipeline overlap + v7x cores).
    if B >= 2:
        bt = min(bt, (B + 1) // 2)
    # Prefer an even grid extent (megacore load balance) as long as the x DMA
    # block does not drop below the per-generation minimum block size.
    if cdiv(B, bt) % 2 == 1 and cdiv(B, bt) > 1:
        for cand in range(bt - 1, 0, -1):
            if cdiv(B, cand) % 2 == 0 and cand * N * F * 4 >= min_block_bytes:
                bt = cand
                break
    return int(bt)


def graph_unet_pooling(x, p, topk, *, batch_tile=None):
    """x: (B, N, F) float32, p: (F, 1) float32 -> (B, topk, F)."""
    B, N, F = x.shape
    assert p.shape == (F, 1)
    assert topk <= N, "topk must be <= number of nodes (torch.topk would error)"

    # ---- per-generation VMEM caps -------------------------------------------
    try:
        info = pltpu.get_tpu_info()
        vmem_cap = int(getattr(info, "vmem_capacity_bytes", 64 << 20))
    except Exception:
        vmem_cap = 64 << 20                       # conservative (v7x-like)
    if vmem_cap >= (96 << 20):                    # v5e / v6e: 128 MiB VMEM
        choose_budget = 64 << 20
        limit_cap = 100 << 20
        min_block_bytes = 2 << 20
    else:                                         # v7x: 64 MiB VMEM per TC
        choose_budget = 38 << 20
        limit_cap = 46 << 20
        min_block_bytes = 4 << 20

    if batch_tile is None:
        batch_tile = _choose_batch_tile(B, N, F, topk,
                                        choose_budget, min_block_bytes)
    batch_tile = int(min(max(batch_tile, 1), B))
    grid_b = pl.cdiv(B, batch_tile)               # partial last block allowed

    # Pre-normalized, lane-dense (1, F) parameter row: p / ||p||.
    p_row = (p.astype(jnp.float32)
             * jax.lax.rsqrt(jnp.sum(p.astype(jnp.float32) ** 2))).reshape(1, F)

    est = batch_tile * _per_batch_vmem_bytes(N, F, topk) + (4 << 20)  # headroom
    vmem_limit = int(min(max(est, 32 << 20), limit_cap))

    kernel = partial(_pool_kernel, topk=topk)
    return pl.pallas_call(
        kernel,
        out_shape=jax.ShapeDtypeStruct((B, topk, F), x.dtype),
        grid=(grid_b,),
        in_specs=[
            pl.BlockSpec((batch_tile, N, F), lambda b: (b, 0, 0)),
            pl.BlockSpec((1, F), lambda b: (0, 0)),
        ],
        out_specs=pl.BlockSpec((batch_tile, topk, F), lambda b: (b, 0, 0)),
        compiler_params=pltpu.CompilerParams(
            dimension_semantics=("parallel",),
            vmem_limit_bytes=vmem_limit,
        ),
    )(x, p_row)


def _ref_forward(x, p, topk):
    # Pure-JAX reference mirroring the PyTorch forward.
    y = jnp.matmul(x, p) / jnp.linalg.norm(p)                   # (B, N, 1)
    vals, idxs = jax.lax.top_k(y[..., 0], topk)                 # (B, K), (B, K)
    yk = jax.nn.sigmoid(vals)[..., None]                        # (B, K, 1)
    gathered = jnp.take_along_axis(x, idxs[..., None], axis=1)  # (B, K, F)
    return gathered * yk


if __name__ == "__main__":
    B, N, F, K = 2, 16, 32, 8

    key = jax.random.PRNGKey(0)
    kx, kp = jax.random.split(key)
    x = jax.random.normal(kx, (B, N, F), dtype=jnp.float32)

    # Deterministic xavier_uniform_(gain=1.414) init for p of shape (F, 1):
    # bound = gain * sqrt(6 / (fan_in + fan_out)) with fan_in=1, fan_out=F.
    gain = 1.414
    bound = gain * float(np.sqrt(6.0 / (F + 1)))
    p = jax.random.uniform(kp, (F, 1), dtype=jnp.float32,
                           minval=-bound, maxval=bound)

    out = graph_unet_pooling(x, p, K)
    out = jax.block_until_ready(out)

    ref = _ref_forward(x, p, K)
    assert out.shape == (B, K, F)
    assert np.allclose(np.asarray(out), np.asarray(ref), atol=1e-5, rtol=1e-4)
    print("KERNEL_OK")
</pallas_src>

<mosaic_0001>
module attributes {stable_mosaic.version = 11 : i64} {
  func.func @_pool_kernel(%arg0: i32, %arg1: memref<1x16x32xf32, #tpu.memory_space<vmem>>, %arg2: memref<1x32xf32, #tpu.memory_space<vmem>>, %arg3: memref<1x8x32xf32, #tpu.memory_space<vmem>>) attributes {dimension_semantics = [#tpu.dimension_semantics<parallel>], iteration_bounds = array<i64: 2>, scalar_prefetch = 0 : i64, scratch_operands = 0 : i64, tpu.core_type = #tpu.core_type<tc>, window_params = [{transform_indices = @transform_0, window_bounds = array<i64: 1, 16, 32>}, {pipeline_mode = #tpu.pipeline_mode<synchronous>, transform_indices = @transform_1, window_bounds = array<i64: 1, 32>}, {transform_indices = @transform_2, window_bounds = array<i64: 1, 8, 32>}]} {
    %c0 = arith.constant 0 : index
    %c0_0 = arith.constant 0 : index
    %c0_1 = arith.constant 0 : index
    %0 = vector.load %arg1[%c0, %c0_0, %c0_1] : memref<1x16x32xf32, #tpu.memory_space<vmem>>, vector<1x16x32xf32>
    %c0_2 = arith.constant 0 : index
    %c0_3 = arith.constant 0 : index
    %1 = vector.load %arg2[%c0_2, %c0_3] : memref<1x32xf32, #tpu.memory_space<vmem>>, vector<1x32xf32>
    %2 = vector.shape_cast %1 : vector<1x32xf32> to vector<1x1x32xf32>
    %3 = vector.broadcast %2 : vector<1x1x32xf32> to vector<1x16x32xf32>
    %4 = arith.mulf %0, %3 : vector<1x16x32xf32>
    %cst = arith.constant dense<0.000000e+00> : vector<1x16xf32>
    %5 = vector.multi_reduction <add>, %4, %cst [2] : vector<1x16x32xf32> to vector<1x16xf32>
    %6 = tpu.iota {dimensions = array<i32: 1>} : vector<1x16xi32>
    %7 = tpu.iota {dimensions = array<i32: 1>} : vector<1x8xi32>
    %cst_4 = arith.constant 0.000000e+00 : f32
    %8 = vector.broadcast %cst_4 : f32 to vector<1x8xf32>
    %c0_i32 = arith.constant 0 : i32
    %9 = vector.broadcast %c0_i32 : i32 to vector<1x8xi32>
    %c0_i32_5 = arith.constant 0 : i32
    %cst_6 = arith.constant dense<0xFF800000> : vector<1xf32>
    %10 = vector.multi_reduction <maximumf>, %5, %cst_6 [1] : vector<1x16xf32> to vector<1xf32>
    %11 = vector.shape_cast %10 : vector<1xf32> to vector<1x1xf32>
    %12 = vector.broadcast %11 : vector<1x1xf32> to vector<1x16xf32>
    %13 = arith.cmpf oeq, %5, %12 : vector<1x16xf32>
    %c16_i32 = arith.constant 16 : i32
    %14 = vector.broadcast %c16_i32 : i32 to vector<1x16xi32>
    %15 = arith.select %13, %6, %14 : vector<1x16xi1>, vector<1x16xi32>
    %cst_7 = arith.constant dense<2147483647> : vector<1xi32>
    %16 = vector.multi_reduction <minsi>, %15, %cst_7 [1] : vector<1x16xi32> to vector<1xi32>
    %17 = vector.shape_cast %16 : vector<1xi32> to vector<1x1xi32>
    %18 = vector.broadcast %c0_i32_5 : i32 to vector<1x8xi32>
    %19 = arith.cmpi eq, %7, %18 : vector<1x8xi32>
    %20 = vector.shape_cast %11 : vector<1x1xf32> to vector<1x1xf32>
    %21 = vector.broadcast %20 : vector<1x1xf32> to vector<1x8xf32>
    %22 = arith.select %19, %21, %8 : vector<1x8xi1>, vector<1x8xf32>
    %23 = vector.broadcast %c0_i32_5 : i32 to vector<1x8xi32>
    %24 = arith.cmpi eq, %7, %23 : vector<1x8xi32>
    %25 = vector.shape_cast %17 : vector<1x1xi32> to vector<1x1xi32>
    %26 = vector.broadcast %25 : vector<1x1xi32> to vector<1x8xi32>
    %27 = arith.select %24, %26, %9 : vector<1x8xi1>, vector<1x8xi32>
    %28 = vector.broadcast %17 : vector<1x1xi32> to vector<1x16xi32>
    %29 = arith.cmpi eq, %6, %28 : vector<1x16xi32>
    %cst_8 = arith.constant 0xFF800000 : f32
    %30 = vector.broadcast %cst_8 : f32 to vector<1x16xf32>
    %31 = arith.select %29, %30, %5 : vector<1x16xi1>, vector<1x16xf32>
    %c1_i32 = arith.constant 1 : i32
    %cst_9 = arith.constant dense<0xFF800000> : vector<1xf32>
    %32 = vector.multi_reduction <maximumf>, %31, %cst_9 [1] : vector<1x16xf32> to vector<1xf32>
    %33 = vector.shape_cast %32 : vector<1xf32> to vector<1x1xf32>
    %34 = vector.broadcast %33 : vector<1x1xf32> to vector<1x16xf32>
    %35 = arith.cmpf oeq, %31, %34 : vector<1x16xf32>
    %c16_i32_10 = arith.constant 16 : i32
    %36 = vector.broadcast %c16_i32_10 : i32 to vector<1x16xi32>
    %37 = arith.select %35, %6, %36 : vector<1x16xi1>, vector<1x16xi32>
    %cst_11 = arith.constant dense<2147483647> : vector<1xi32>
    %38 = vector.multi_reduction <minsi>, %37, %cst_11 [1] : vector<1x16xi32> to vector<1xi32>
    %39 = vector.shape_cast %38 : vector<1xi32> to vector<1x1xi32>
    %40 = vector.broadcast %c1_i32 : i32 to vector<1x8xi32>
    %41 = arith.cmpi eq, %7, %40 : vector<1x8xi32>
    %42 = vector.shape_cast %33 : vector<1x1xf32> to vector<1x1xf32>
    %43 = vector.broadcast %42 : vector<1x1xf32> to vector<1x8xf32>
    %44 = arith.select %41, %43, %22 : vector<1x8xi1>, vector<1x8xf32>
    %45 = vector.broadcast %c1_i32 : i32 to vector<1x8xi32>
    %46 = arith.cmpi eq, %7, %45 : vector<1x8xi32>
    %47 = vector.shape_cast %39 : vector<1x1xi32> to vector<1x1xi32>
    %48 = vector.broadcast %47 : vector<1x1xi32> to vector<1x8xi32>
    %49 = arith.select %46, %48, %27 : vector<1x8xi1>, vector<1x8xi32>
    %50 = vector.broadcast %39 : vector<1x1xi32> to vector<1x16xi32>
    %51 = arith.cmpi eq, %6, %50 : vector<1x16xi32>
    %cst_12 = arith.constant 0xFF800000 : f32
    %52 = vector.broadcast %cst_12 : f32 to vector<1x16xf32>
    %53 = arith.select %51, %52, %31 : vector<1x16xi1>, vector<1x16xf32>
    %c2_i32 = arith.constant 2 : i32
    %cst_13 = arith.constant dense<0xFF800000> : vector<1xf32>
    %54 = vector.multi_reduction <maximumf>, %53, %cst_13 [1] : vector<1x16xf32> to vector<1xf32>
    %55 = vector.shape_cast %54 : vector<1xf32> to vector<1x1xf32>
    %56 = vector.broadcast %55 : vector<1x1xf32> to vector<1x16xf32>
    %57 = arith.cmpf oeq, %53, %56 : vector<1x16xf32>
    %c16_i32_14 = arith.constant 16 : i32
    %58 = vector.broadcast %c16_i32_14 : i32 to vector<1x16xi32>
    %59 = arith.select %57, %6, %58 : vector<1x16xi1>, vector<1x16xi32>
    %cst_15 = arith.constant dense<2147483647> : vector<1xi32>
    %60 = vector.multi_reduction <minsi>, %59, %cst_15 [1] : vector<1x16xi32> to vector<1xi32>
    %61 = vector.shape_cast %60 : vector<1xi32> to vector<1x1xi32>
    %62 = vector.broadcast %c2_i32 : i32 to vector<1x8xi32>
    %63 = arith.cmpi eq, %7, %62 : vector<1x8xi32>
    %64 = vector.shape_cast %55 : vector<1x1xf32> to vector<1x1xf32>
    %65 = vector.broadcast %64 : vector<1x1xf32> to vector<1x8xf32>
    %66 = arith.select %63, %65, %44 : vector<1x8xi1>, vector<1x8xf32>
    %67 = vector.broadcast %c2_i32 : i32 to vector<1x8xi32>
    %68 = arith.cmpi eq, %7, %67 : vector<1x8xi32>
    %69 = vector.shape_cast %61 : vector<1x1xi32> to vector<1x1xi32>
    %70 = vector.broadcast %69 : vector<1x1xi32> to vector<1x8xi32>
    %71 = arith.select %68, %70, %49 : vector<1x8xi1>, vector<1x8xi32>
    %72 = vector.broadcast %61 : vector<1x1xi32> to vector<1x16xi32>
    %73 = arith.cmpi eq, %6, %72 : vector<1x16xi32>
    %cst_16 = arith.constant 0xFF800000 : f32
    %74 = vector.broadcast %cst_16 : f32 to vector<1x16xf32>
    %75 = arith.select %73, %74, %53 : vector<1x16xi1>, vector<1x16xf32>
    %c3_i32 = arith.constant 3 : i32
    %cst_17 = arith.constant dense<0xFF800000> : vector<1xf32>
    %76 = vector.multi_reduction <maximumf>, %75, %cst_17 [1] : vector<1x16xf32> to vector<1xf32>
    %77 = vector.shape_cast %76 : vector<1xf32> to vector<1x1xf32>
    %78 = vector.broadcast %77 : vector<1x1xf32> to vector<1x16xf32>
    %79 = arith.cmpf oeq, %75, %78 : vector<1x16xf32>
    %c16_i32_18 = arith.constant 16 : i32
    %80 = vector.broadcast %c16_i32_18 : i32 to vector<1x16xi32>
    %81 = arith.select %79, %6, %80 : vector<1x16xi1>, vector<1x16xi32>
    %cst_19 = arith.constant dense<2147483647> : vector<1xi32>
    %82 = vector.multi_reduction <minsi>, %81, %cst_19 [1] : vector<1x16xi32> to vector<1xi32>
    %83 = vector.shape_cast %82 : vector<1xi32> to vector<1x1xi32>
    %84 = vector.broadcast %c3_i32 : i32 to vector<1x8xi32>
    %85 = arith.cmpi eq, %7, %84 : vector<1x8xi32>
    %86 = vector.shape_cast %77 : vector<1x1xf32> to vector<1x1xf32>
    %87 = vector.broadcast %86 : vector<1x1xf32> to vector<1x8xf32>
    %88 = arith.select %85, %87, %66 : vector<1x8xi1>, vector<1x8xf32>
    %89 = vector.broadcast %c3_i32 : i32 to vector<1x8xi32>
    %90 = arith.cmpi eq, %7, %89 : vector<1x8xi32>
    %91 = vector.shape_cast %83 : vector<1x1xi32> to vector<1x1xi32>
    %92 = vector.broadcast %91 : vector<1x1xi32> to vector<1x8xi32>
    %93 = arith.select %90, %92, %71 : vector<1x8xi1>, vector<1x8xi32>
    %94 = vector.broadcast %83 : vector<1x1xi32> to vector<1x16xi32>
    %95 = arith.cmpi eq, %6, %94 : vector<1x16xi32>
    %cst_20 = arith.constant 0xFF800000 : f32
    %96 = vector.broadcast %cst_20 : f32 to vector<1x16xf32>
    %97 = arith.select %95, %96, %75 : vector<1x16xi1>, vector<1x16xf32>
    %c4_i32 = arith.constant 4 : i32
    %cst_21 = arith.constant dense<0xFF800000> : vector<1xf32>
    %98 = vector.multi_reduction <maximumf>, %97, %cst_21 [1] : vector<1x16xf32> to vector<1xf32>
    %99 = vector.shape_cast %98 : vector<1xf32> to vector<1x1xf32>
    %100 = vector.broadcast %99 : vector<1x1xf32> to vector<1x16xf32>
    %101 = arith.cmpf oeq, %97, %100 : vector<1x16xf32>
    %c16_i32_22 = arith.constant 16 : i32
    %102 = vector.broadcast %c16_i32_22 : i32 to vector<1x16xi32>
    %103 = arith.select %101, %6, %102 : vector<1x16xi1>, vector<1x16xi32>
    %cst_23 = arith.constant dense<2147483647> : vector<1xi32>
    %104 = vector.multi_reduction <minsi>, %103, %cst_23 [1] : vector<1x16xi32> to vector<1xi32>
    %105 = vector.shape_cast %104 : vector<1xi32> to vector<1x1xi32>
    %106 = vector.broadcast %c4_i32 : i32 to vector<1x8xi32>
    %107 = arith.cmpi eq, %7, %106 : vector<1x8xi32>
    %108 = vector.shape_cast %99 : vector<1x1xf32> to vector<1x1xf32>
    %109 = vector.broadcast %108 : vector<1x1xf32> to vector<1x8xf32>
    %110 = arith.select %107, %109, %88 : vector<1x8xi1>, vector<1x8xf32>
    %111 = vector.broadcast %c4_i32 : i32 to vector<1x8xi32>
    %112 = arith.cmpi eq, %7, %111 : vector<1x8xi32>
    %113 = vector.shape_cast %105 : vector<1x1xi32> to vector<1x1xi32>
    %114 = vector.broadcast %113 : vector<1x1xi32> to vector<1x8xi32>
    %115 = arith.select %112, %114, %93 : vector<1x8xi1>, vector<1x8xi32>
    %116 = vector.broadcast %105 : vector<1x1xi32> to vector<1x16xi32>
    %117 = arith.cmpi eq, %6, %116 : vector<1x16xi32>
    %cst_24 = arith.constant 0xFF800000 : f32
    %118 = vector.broadcast %cst_24 : f32 to vector<1x16xf32>
    %119 = arith.select %117, %118, %97 : vector<1x16xi1>, vector<1x16xf32>
    %c5_i32 = arith.constant 5 : i32
    %cst_25 = arith.constant dense<0xFF800000> : vector<1xf32>
    %120 = vector.multi_reduction <maximumf>, %119, %cst_25 [1] : vector<1x16xf32> to vector<1xf32>
    %121 = vector.shape_cast %120 : vector<1xf32> to vector<1x1xf32>
    %122 = vector.broadcast %121 : vector<1x1xf32> to vector<1x16xf32>
    %123 = arith.cmpf oeq, %119, %122 : vector<1x16xf32>
    %c16_i32_26 = arith.constant 16 : i32
    %124 = vector.broadcast %c16_i32_26 : i32 to vector<1x16xi32>
    %125 = arith.select %123, %6, %124 : vector<1x16xi1>, vector<1x16xi32>
    %cst_27 = arith.constant dense<2147483647> : vector<1xi32>
    %126 = vector.multi_reduction <minsi>, %125, %cst_27 [1] : vector<1x16xi32> to vector<1xi32>
    %127 = vector.shape_cast %126 : vector<1xi32> to vector<1x1xi32>
    %128 = vector.broadcast %c5_i32 : i32 to vector<1x8xi32>
    %129 = arith.cmpi eq, %7, %128 : vector<1x8xi32>
    %130 = vector.shape_cast %121 : vector<1x1xf32> to vector<1x1xf32>
    %131 = vector.broadcast %130 : vector<1x1xf32> to vector<1x8xf32>
    %132 = arith.select %129, %131, %110 : vector<1x8xi1>, vector<1x8xf32>
    %133 = vector.broadcast %c5_i32 : i32 to vector<1x8xi32>
    %134 = arith.cmpi eq, %7, %133 : vector<1x8xi32>
    %135 = vector.shape_cast %127 : vector<1x1xi32> to vector<1x1xi32>
    %136 = vector.broadcast %135 : vector<1x1xi32> to vector<1x8xi32>
    %137 = arith.select %134, %136, %115 : vector<1x8xi1>, vector<1x8xi32>
    %138 = vector.broadcast %127 : vector<1x1xi32> to vector<1x16xi32>
    %139 = arith.cmpi eq, %6, %138 : vector<1x16xi32>
    %cst_28 = arith.constant 0xFF800000 : f32
    %140 = vector.broadcast %cst_28 : f32 to vector<1x16xf32>
    %141 = arith.select %139, %140, %119 : vector<1x16xi1>, vector<1x16xf32>
    %c6_i32 = arith.constant 6 : i32
    %cst_29 = arith.constant dense<0xFF800000> : vector<1xf32>
    %142 = vector.multi_reduction <maximumf>, %141, %cst_29 [1] : vector<1x16xf32> to vector<1xf32>
    %143 = vector.shape_cast %142 : vector<1xf32> to vector<1x1xf32>
    %144 = vector.broadcast %143 : vector<1x1xf32> to vector<1x16xf32>
    %145 = arith.cmpf oeq, %141, %144 : vector<1x16xf32>
    %c16_i32_30 = arith.constant 16 : i32
    %146 = vector.broadcast %c16_i32_30 : i32 to vector<1x16xi32>
    %147 = arith.select %145, %6, %146 : vector<1x16xi1>, vector<1x16xi32>
    %cst_31 = arith.constant dense<2147483647> : vector<1xi32>
    %148 = vector.multi_reduction <minsi>, %147, %cst_31 [1] : vector<1x16xi32> to vector<1xi32>
    %149 = vector.shape_cast %148 : vector<1xi32> to vector<1x1xi32>
    %150 = vector.broadcast %c6_i32 : i32 to vector<1x8xi32>
    %151 = arith.cmpi eq, %7, %150 : vector<1x8xi32>
    %152 = vector.shape_cast %143 : vector<1x1xf32> to vector<1x1xf32>
    %153 = vector.broadcast %152 : vector<1x1xf32> to vector<1x8xf32>
    %154 = arith.select %151, %153, %132 : vector<1x8xi1>, vector<1x8xf32>
    %155 = vector.broadcast %c6_i32 : i32 to vector<1x8xi32>
    %156 = arith.cmpi eq, %7, %155 : vector<1x8xi32>
    %157 = vector.shape_cast %149 : vector<1x1xi32> to vector<1x1xi32>
    %158 = vector.broadcast %157 : vector<1x1xi32> to vector<1x8xi32>
    %159 = arith.select %156, %158, %137 : vector<1x8xi1>, vector<1x8xi32>
    %160 = vector.broadcast %149 : vector<1x1xi32> to vector<1x16xi32>
    %161 = arith.cmpi eq, %6, %160 : vector<1x16xi32>
    %cst_32 = arith.constant 0xFF800000 : f32
    %162 = vector.broadcast %cst_32 : f32 to vector<1x16xf32>
    %163 = arith.select %161, %162, %141 : vector<1x16xi1>, vector<1x16xf32>
    %c7_i32 = arith.constant 7 : i32
    %cst_33 = arith.constant dense<0xFF800000> : vector<1xf32>
    %164 = vector.multi_reduction <maximumf>, %163, %cst_33 [1] : vector<1x16xf32> to vector<1xf32>
    %165 = vector.shape_cast %164 : vector<1xf32> to vector<1x1xf32>
    %166 = vector.broadcast %165 : vector<1x1xf32> to vector<1x16xf32>
    %167 = arith.cmpf oeq, %163, %166 : vector<1x16xf32>
    %c16_i32_34 = arith.constant 16 : i32
    %168 = vector.broadcast %c16_i32_34 : i32 to vector<1x16xi32>
    %169 = arith.select %167, %6, %168 : vector<1x16xi1>, vector<1x16xi32>
    %cst_35 = arith.constant dense<2147483647> : vector<1xi32>
    %170 = vector.multi_reduction <minsi>, %169, %cst_35 [1] : vector<1x16xi32> to vector<1xi32>
    %171 = vector.shape_cast %170 : vector<1xi32> to vector<1x1xi32>
    %172 = vector.broadcast %c7_i32 : i32 to vector<1x8xi32>
    %173 = arith.cmpi eq, %7, %172 : vector<1x8xi32>
    %174 = vector.shape_cast %165 : vector<1x1xf32> to vector<1x1xf32>
    %175 = vector.broadcast %174 : vector<1x1xf32> to vector<1x8xf32>
    %176 = arith.select %173, %175, %154 : vector<1x8xi1>, vector<1x8xf32>
    %177 = vector.broadcast %c7_i32 : i32 to vector<1x8xi32>
    %178 = arith.cmpi eq, %7, %177 : vector<1x8xi32>
    %179 = vector.shape_cast %171 : vector<1x1xi32> to vector<1x1xi32>
    %180 = vector.broadcast %179 : vector<1x1xi32> to vector<1x8xi32>
    %181 = arith.select %178, %180, %159 : vector<1x8xi1>, vector<1x8xi32>
    %182 = vector.broadcast %171 : vector<1x1xi32> to vector<1x16xi32>
    %183 = arith.cmpi eq, %6, %182 : vector<1x16xi32>
    %cst_36 = arith.constant 0xFF800000 : f32
    %184 = vector.broadcast %cst_36 : f32 to vector<1x16xf32>
    %185 = arith.select %183, %184, %163 : vector<1x16xi1>, vector<1x16xf32>
    %c8_i32 = arith.constant 8 : i32
    %186 = arith.negf %176 : vector<1x8xf32>
    %187 = math.exp %186 : vector<1x8xf32>
    %cst_37 = arith.constant 1.000000e+00 : f32
    %188 = vector.broadcast %cst_37 : f32 to vector<1x8xf32>
    %189 = arith.addf %188, %187 : vector<1x8xf32>
    %190 = arith.divf %188, %189 : vector<1x8xf32>
    %191 = tpu.iota {dimensions = array<i32: 2>} : vector<1x8x16xi32>
    %192 = vector.shape_cast %181 : vector<1x8xi32> to vector<1x8x1xi32>
    %193 = vector.broadcast %192 : vector<1x8x1xi32> to vector<1x8x16xi32>
    %194 = arith.cmpi eq, %191, %193 : vector<1x8x16xi32>
    %195 = arith.extui %194 : vector<1x8x16xi1> to vector<1x8x16xi32>
    %196 = arith.sitofp %195 : vector<1x8x16xi32> to vector<1x8x16xf32>
    "tpu.trace_start"() <{level = 10 : i32, message = "bkn,bnf->bkf"}> : () -> ()
    %cst_38 = arith.constant dense<0.000000e+00> : vector<1x8x32xf32>
    %197 = tpu.matmul %196, %0, %cst_38 {dimension_numbers = #tpu.dot_dimension_numbers<[2], [1], [1], [2], [0, 0, 0, 1, 1, 2], [0], [0]>} : vector<1x8x16xf32>, vector<1x16x32xf32>, vector<1x8x32xf32> -> vector<1x8x32xf32>
    "tpu.trace_stop"() : () -> ()
    %198 = vector.shape_cast %190 : vector<1x8xf32> to vector<1x8x1xf32>
    %199 = vector.broadcast %198 : vector<1x8x1xf32> to vector<1x8x32xf32>
    %200 = arith.mulf %197, %199 : vector<1x8x32xf32>
    %c0_39 = arith.constant 0 : index
    %c0_40 = arith.constant 0 : index
    %c0_41 = arith.constant 0 : index
    %201 = vector.load %arg3[%c0_39, %c0_40, %c0_41] : memref<1x8x32xf32, #tpu.memory_space<vmem>>, vector<1x8x32xf32>
    tpu.vector_store %arg3[%c0_39, %c0_40, %c0_41], %200 {strides = array<i32>} : memref<1x8x32xf32, #tpu.memory_space<vmem>>, vector<1x8x32xf32>,
    return
  }
  func.func @transform_0(%arg0: i32) -> (i32, i32, i32) {
    %c0_i32 = arith.constant 0 : i32
    %c0_i32_0 = arith.constant 0 : i32
    %c0_i32_1 = arith.constant 0 : i32
    return %arg0, %c0_i32, %c0_i32_0 : i32, i32, i32
  }
  func.func @transform_1(%arg0: i32) -> (i32, i32) {
    %c0_i32 = arith.constant 0 : i32
    %c0_i32_0 = arith.constant 0 : i32
    %c0_i32_1 = arith.constant 0 : i32
    return %c0_i32, %c0_i32_0 : i32, i32
  }
  func.func @transform_2(%arg0: i32) -> (i32, i32, i32) {
    %c0_i32 = arith.constant 0 : i32
    %c0_i32_0 = arith.constant 0 : i32
    %c0_i32_1 = arith.constant 0 : i32
    return %arg0, %c0_i32, %c0_i32_0 : i32, i32, i32
  }
}

</mosaic_0001>

<llo_original>
// kernel: tpu_custom_call.1
$region0: #{tpu_custom_call.1}
  #allocation0 [shape = 'u32[]', space=smem, size = 0x4, offset = 0x4, fixed_abs, tag = 'smem constant byte address 0x4 - core index']
  #allocation1 [shape = 'u32[144,128]{1,0:T(1,128)}', space=vmem, size = 0x12000, scoped, tag = 'internal scratch']
  %s0 = inlined_call_operand.hbm [shape: f32[2,16,32], index: 0, kind: input, shape index: {}]
  %s1 = inlined_call_operand.vmem [shape: f32[1,32], index: 1, kind: input, shape index: {}]
  %s2 = inlined_call_operand.hbm [shape: f32[2,8,32], index: 2, kind: output, shape index: {}]
  %s3 = sld [smem:[#allocation0]]
  $region45: #{tpu_custom_call.1} parent=0
    _
  %s5 = ssub.s32 1, %s3
  %s6 = scalar_select 0, %s5, %s3
  $region1: #{tpu_custom_call.1} parent=0
    #allocation2 [shape = 'u8[16384]{0}', space=vmem, size = 0x4000, scoped, tag = 'input window, operand 0']
    #allocation3 [shape = 's32[2]{0}', space=sflag, size = 0x8, scoped, tag = 'scoped memory for tpu_custom_call.1']
    #allocation4 [shape = 's32[2]{0}', space=sflag, size = 0x8, scoped, tag = 'scoped memory for tpu_custom_call.1']
    #allocation5 [shape = 'u8[8192]{0}', space=vmem, size = 0x2000, scoped, tag = 'output window, operand 0']
    %7 = vsyncpa [#allocation3], 0
    %s8 = scalar_lea.sflag [#allocation3], 1
    %9 = vsyncpa %s8, 0
    %10 = vsyncpa [#allocation4], 0
    %s11 = scalar_lea.sflag [#allocation4], 1
    %12 = vsyncpa %s11, 0
    loop: start=0, step=1, limit=4
    $region2: #{tpu_custom_call.1} parent=1 // loop_pre_header
      _
    $region3: #{tpu_custom_call.1} parent=1 // loop_header
      %s14 = sphi 0, %s18
      %p15 = scmp.ge.s32.totalorder %s14, 4
      %s24 = sphi 0, %s26
      %s27 = sphi 0, %s24
      %s28 = sphi 0, %s27
      %s44 = sphi 0, %s28
      %s48 = sphi 0, %s48
      %s50 = sphi 0, %s48
      %s51 = sphi 0, %s50
      %s65 = sphi 0, %s51
      %s71 = sphi 0, %s73
      %s74 = sphi 0, %s71
      %s75 = sphi 0, %s74
      %s91 = sphi 0, %s75
    $region4: #{tpu_custom_call.1} parent=1 // loop_header_branch
      %17 = sbr.rel (%p15) target = $region8
    $region5: #{tpu_custom_call.1} parent=1 // loop_body
      %s19 = ssub.s32 %s14, 1
      %s20 = ssub.s32 %s14, 2
      %s21 = sadd.s32 %s14, 1
      %s22 = ssub.s32 %s14, %s21
      %p23 = scmp.eq.s32.totalorder %s22, 0
      %s25 = sadd.s32 %s24, 1
      %s26 = scalar_select %p23, %s24, %s25
      %p29 = pneg %p23
      %p30 = scmp.eq.s32.totalorder %s14, 1
      %p31 = por %p29, %p30
      %p32 = scmp.ne.s32.totalorder %s24, %s27
      %p33 = scmp.eq.s32.totalorder %s14, 0
      %p34 = por %p32, %p33
      %p35 = scmp.ne.s32.totalorder %s24, %s27
      %p36 = scmp.eq.s32.totalorder %s19, 1
      %p37 = por %p35, %p36
      %p38 = scmp.ne.s32.totalorder %s27, %s28
      %p39 = scmp.eq.s32.totalorder %s19, 0
      %p40 = por %p38, %p39
      %p41 = scmp.ne.s32.totalorder %s27, %s28
      %p42 = scmp.eq.s32.totalorder %s20, 1
      %p43 = por %p41, %p42
      %p45 = scmp.ne.s32.totalorder %s28, %s44
      %p46 = scmp.eq.s32.totalorder %s20, 0
      %p47 = por %p45, %p46
      %s49 = sadd.s32 %s48, 1
      %p52 = scmp.eq.s32.totalorder %s14, 1
      %p53 = scmp.ne.s32.totalorder %s48, %s50
      %p54 = scmp.eq.s32.totalorder %s14, 0
      %p55 = por %p53, %p54
      %p56 = scmp.ne.s32.totalorder %s48, %s50
      %p57 = scmp.eq.s32.totalorder %s19, 1
      %p58 = por %p56, %p57
      %p59 = scmp.ne.s32.totalorder %s50, %s51
      %p60 = scmp.eq.s32.totalorder %s19, 0
      %p61 = por %p59, %p60
      %p62 = scmp.ne.s32.totalorder %s50, %s51
      %p63 = scmp.eq.s32.totalorder %s20, 1
      %p64 = por %p62, %p63
      %p66 = scmp.ne.s32.totalorder %s51, %s65
      %p67 = scmp.eq.s32.totalorder %s20, 0
      %p68 = por %p66, %p67
      %s69 = ssub.s32 %s14, %s21
      %p70 = scmp.eq.s32.totalorder %s69, 0
      %s72 = sadd.s32 %s71, 1
      %s73 = scalar_select %p70, %s71, %s72
      %p76 = pneg %p70
      %p77 = scmp.eq.s32.totalorder %s14, 1
      %p78 = por %p76, %p77
      %p79 = scmp.ne.s32.totalorder %s71, %s74
      %p80 = scmp.eq.s32.totalorder %s14, 0
      %p81 = por %p79, %p80
      %p82 = scmp.ne.s32.totalorder %s71, %s74
      %p83 = scmp.eq.s32.totalorder %s19, 1
      %p84 = por %p82, %p83
      %p85 = scmp.ne.s32.totalorder %s74, %s75
      %p86 = scmp.eq.s32.totalorder %s19, 0
      %p87 = por %p85, %p86
      %p88 = scmp.ne.s32.totalorder %s74, %s75
      %p89 = scmp.eq.s32.totalorder %s20, 1
      %p90 = por %p88, %p89
      %p92 = scmp.ne.s32.totalorder %s75, %s91
      %p93 = scmp.eq.s32.totalorder %s20, 0
      %p94 = por %p92, %p93
      %p95 = scmp.le.s32.totalorder 1, %s14
      %p96 = scmp.lt.s32.totalorder %s14, 3
      %p97 = pnand %p95, %p96
      %p98 = pneg %p97
      // Predicated region
      $region9: #{tpu_custom_call.1} parent=5 // pred_check
        _
      $region10: #{tpu_custom_call.1} parent=5 // pred_check_branch
        %100 = sbr.rel (%p97) target = $region12
      $region11: #{tpu_custom_call.1} parent=5 // pred_region
        %s101 = ssub.s32 %s14, 1
        // Predicated region
        $region13: #{tpu_custom_call.1} parent=11 // pred_check
          %p102 = pneg %p61
        $region14: #{tpu_custom_call.1} parent=11 // pred_check_branch
          %104 = sbr.rel (%p102) target = $region16
        $region15: #{tpu_custom_call.1} parent=11 // pred_region
          _
        $region16: #{tpu_custom_call.1} parent=11 // pred_fallthru
          _
      $region12: #{tpu_custom_call.1} parent=5 // pred_fallthru
        _
      %p105 = scmp.lt.s32.totalorder %s14, 2
      // Predicated region
      $region17: #{tpu_custom_call.1} parent=5 // pred_check
        %p106 = pneg %p105
      $region18: #{tpu_custom_call.1} parent=5 // pred_check_branch
        %108 = sbr.rel (%p106) target = $region20
      $region19: #{tpu_custom_call.1} parent=5 // pred_region
        // Predicated region
        $region21: #{tpu_custom_call.1} parent=19 // pred_check
          %p109 = pneg %p34
        $region22: #{tpu_custom_call.1} parent=19 // pred_check_branch
          %111 = sbr.rel (%p109) target = $region24
        $region23: #{tpu_custom_call.1} parent=19 // pred_region
          %s112 = sand.u32 %s24, 1
          %s113 = scalar_lea.sflag [#allocation3], %s112
          %s114 = sand.u32 %s24, 1
          %s115 = smul.addr %s114, 16
          %s116 = scalar_lea.vmem [#allocation2], %s115
          %s118 = ssub.s32 256, 256
          %119 = vsyncadd %s113, %s118
          %s120 = smul.addr %s14, 2
          %s121 = smul.addr %s120, 128
          %s122 = scalar_lea.hbm %s0, %s121
          %s123 = sshll.u32 %s116, 4
          %s124 = int_to_ptr.vmem [resolvable:$true] %s123
          %129 = dma.hbm_to_vmem [thread:$0]  %s122, 256, %s124, %s113, 128, 128, 8
        $region24: #{tpu_custom_call.1} parent=19 // pred_fallthru
          _
      $region20: #{tpu_custom_call.1} parent=5 // pred_fallthru
        _
      %p130 = scmp.le.s32.totalorder 1, %s14
      %p131 = scmp.lt.s32.totalorder %s14, 3
      %p132 = pnand %p130, %p131
      %p133 = pneg %p132
      // Predicated region
      $region25: #{tpu_custom_call.1} parent=5 // pred_check
        _
      $region26: #{tpu_custom_call.1} parent=5 // pred_check_branch
        %135 = sbr.rel (%p132) target = $region28
      $region27: #{tpu_custom_call.1} parent=5 // pred_region
        %s136 = ssub.s32 %s14, 1
        %s137 = sand.u32 %s27, 1
        %s138 = scalar_lea.sflag [#allocation3], %s137
        %s139 = sand.u32 %s27, 1
        %s140 = smul.addr %s139, 16
        %s141 = scalar_lea.vmem [#allocation2], %s140
        // Predicated region
        $region29: #{tpu_custom_call.1} parent=27 // pred_check
          %p142 = pneg %p40
        $region30: #{tpu_custom_call.1} parent=27 // pred_check_branch
          %144 = sbr.rel (%p142) target = $region32
        $region31: #{tpu_custom_call.1} parent=27 // pred_region
          %145 = dma.done %s138, 256
        $region32: #{tpu_custom_call.1} parent=27 // pred_fallthru
          _
        %s146 = sand.u32 %s27, 1
        %s147 = scalar_lea.sflag [#allocation3], %s146
        %s148 = sand.u32 %s27, 1
        %s149 = smul.addr %s148, 16
        %s150 = scalar_lea.vmem [#allocation2], %s149
        %p151 = pneg %p40
        %p152 = pneg %p37
        %p153 = pneg %p61
        %p154 = pneg %p58
        %p155 = pneg %p87
        %p156 = pneg %p84
        %s157 = sand.u32 %s74, 1
        %s158 = scalar_lea.sflag [#allocation4], %s157
        %s159 = sand.u32 %s74, 1
        %s160 = smul.addr %s159, 8
        %s161 = scalar_lea.vmem [#allocation5], %s160
        %v162 = vld [vmem:[%s141] sm:$0xff]
        %v163 = vld [vmem:[%s141 + $0x8] sm:$0xff]
        %v164 = vld [vmem:[%s1] sm:$0x1]
        %v166 = vlaneseq
        %v167 = vshrl.u32 %v166, 7
        %v168 = vsub.s32 0, %v167
        %v169 = vrot.slane %v164, %v168
        %v171 = vmul.f32 %v162, %v169
        %v172 = vmul.f32 %v163, %v169
        %vm173 = vcmask 261120
        %v174 = vsel %vm173, %v171, 0.0
        %175 = vadd.xlane.f32.xlu0 %v174
        %v176 = vpop.xlane.xlu0 %175
        %v177 = vsel %vm173, %v172, 0.0
        %178 = vadd.xlane.f32.xlu0 %v177
        %v179 = vpop.xlane.xlu0 %178
        %v180 = vlaneseq
        %v181 = vand.u32 %v180, 127
        %v182 = vmax.f32 %v176, %v179
        %v183 = vrot.slane %v182, 4
        %v184 = vmax.f32 %v182, %v183
        %v185 = vrot.slane %v184, 2
        %v186 = vmax.f32 %v184, %v185
        %v187 = vrot.slane %v186, 1
        %v188 = vmax.f32 %v186, %v187
        %vm189 = vcmp.eq.f32.partialorder %v176, %v188
        %vm190 = vcmp.eq.f32.partialorder %v179, %v188
        %192 = vbcast.lane.b32.xlu0 %v181, 256
        %v193 = vpop.permute.xlu0 %192
        %s195 = sor.u32 256, 8
        %196 = vbcast.lane.b32.xlu0 %v181, %s195
        %v197 = vpop.permute.xlu0 %196
        %v198 = vsel %vm189, %v193, 16
        %v199 = vsel %vm190, %v197, 16
        %vm200 = vcmask 7168
        %v201 = vsel %vm200, %v198, 2147483647
        %v202 = vsel %vm200, %v199, 2147483647
        %vm203 = vcmp.lt.s32.totalorder %v201, %v202
        %v204 = vsel %vm203, %v201, %v202
        %v205 = vrot.slane %v204, 4
        %vm206 = vcmp.lt.s32.totalorder %v204, %v205
        %v207 = vsel %vm206, %v204, %v205
        %v208 = vrot.slane %v207, 2
        %vm209 = vcmp.lt.s32.totalorder %v207, %v208
        %v210 = vsel %vm209, %v207, %v208
        %v211 = vrot.slane %v210, 1
        %vm212 = vcmp.lt.s32.totalorder %v210, %v211
        %v213 = vsel %vm212, %v210, %v211
        %vm214 = vcmp.eq.s32.totalorder %v181, 0
        %v215 = vsel %vm214, %v188, 0.0
        %216 = vset.pattern.permute.xlu0 0
        %217 = vperm.xlu0 %216, %v213
        %v218 = vpop.permute.xlu0 %217
        %v219 = vsel %vm214, %v218, 0
        %vm220 = vcmp.eq.s32.totalorder %v181, %v218
        %v223 = vlaneseq
        %v224 = vshrl.u32 %v223, 7
        %v225 = vsub.s32 %v181, %v224
        %v226 = vrot.slane %v176, %v225
        %v227 = vadd.s32 %v181, 4294967288
        %v228 = vlaneseq
        %v229 = vshrl.u32 %v228, 7
        %v230 = vsub.s32 %v227, %v229
        %v231 = vrot.slane %v179, %v230
        %vm232 = vcmask 130112
        %v233 = vsel %vm232, %v231, %v226
        %v235 = vsel %vm220, -inf, %v233
        %vm236 = vcmask 122880
        %v237 = vsel %vm236, %v235, -inf
        %238 = vmax.xlane.f32.xlu0 %v237
        %v239 = vpop.xlane.xlu0 %238
        %vm240 = vcmp.eq.f32.partialorder %v235, %v239
        %v241 = vsel %vm240, %v181, 16
        %v242 = vsel %vm236, %v241, 2147483647
        %v243 = vand.u32 %v242, 65535
        %v244 = vshra.s32 %v242, 16
        %v245 = vcvt.s32.f32 %v243
        %v246 = vcvt.s32.f32 %v244
        %247 = vmin.xlane.f32.xlu0 %v246
        %v248 = vpop.xlane.xlu0 %247
        %vm249 = vcmp.eq.f32.partialorder %v246, %v248
        %v250 = vsel %vm249, %v245, inf
        %251 = vmin.xlane.f32.xlu0 %v250
        %v252 = vpop.xlane.xlu0 %251
        %v253 = vcvt.f32.s32 %v252
        %v254 = vcvt.f32.s32 %v248
        %v255 = vshll.u32 %v254, 16
        %v256 = vadd.s32 %v255, %v253
        %vm257 = vcmp.eq.s32.totalorder %v181, 1
        %v258 = vsel %vm257, %v239, %v215
        %v259 = vsel %vm257, %v256, %v219
        %vm260 = vcmp.eq.s32.totalorder %v181, %v256
        %v261 = vsel %vm260, -inf, %v235
        %v262 = vsel %vm236, %v261, -inf
        %263 = vmax.xlane.f32.xlu0 %v262
        %v264 = vpop.xlane.xlu0 %263
        %vm265 = vcmp.eq.f32.partialorder %v261, %v264
        %v266 = vsel %vm265, %v181, 16
        %v267 = vsel %vm236, %v266, 2147483647
        %v268 = vand.u32 %v267, 65535
        %v269 = vshra.s32 %v267, 16
        %v270 = vcvt.s32.f32 %v268
        %v271 = vcvt.s32.f32 %v269
        %272 = vmin.xlane.f32.xlu0 %v271
        %v273 = vpop.xlane.xlu0 %272
        %vm274 = vcmp.eq.f32.partialorder %v271, %v273
        %v275 = vsel %vm274, %v270, inf
        %276 = vmin.xlane.f32.xlu0 %v275
        %v277 = vpop.xlane.xlu0 %276
        %v278 = vcvt.f32.s32 %v277
        %v279 = vcvt.f32.s32 %v273
        %v280 = vshll.u32 %v279, 16
        %v281 = vadd.s32 %v280, %v278
        %vm282 = vcmp.eq.s32.totalorder %v181, 2
        %v283 = vsel %vm282, %v264, %v258
        %v284 = vsel %vm282, %v281, %v259
        %vm285 = vcmp.eq.s32.totalorder %v181, %v281
        %v286 = vsel %vm285, -inf, %v261
        %v287 = vsel %vm236, %v286, -inf
        %288 = vmax.xlane.f32.xlu0 %v287
        %v289 = vpop.xlane.xlu0 %288
        %vm290 = vcmp.eq.f32.partialorder %v286, %v289
        %v291 = vsel %vm290, %v181, 16
        %v292 = vsel %vm236, %v291, 2147483647
        %v293 = vand.u32 %v292, 65535
        %v294 = vshra.s32 %v292, 16
        %v295 = vcvt.s32.f32 %v293
        %v296 = vcvt.s32.f32 %v294
        %297 = vmin.xlane.f32.xlu0 %v296
        %v298 = vpop.xlane.xlu0 %297
        %vm299 = vcmp.eq.f32.partialorder %v296, %v298
        %v300 = vsel %vm299, %v295, inf
        %301 = vmin.xlane.f32.xlu0 %v300
        %v302 = vpop.xlane.xlu0 %301
        %v303 = vcvt.f32.s32 %v302
        %v304 = vcvt.f32.s32 %v298
        %v305 = vshll.u32 %v304, 16
        %v306 = vadd.s32 %v305, %v303
        %vm307 = vcmp.eq.s32.totalorder %v181, 3
        %v308 = vsel %vm307, %v289, %v283
        %v309 = vsel %vm307, %v306, %v284
        %vm310 = vcmp.eq.s32.totalorder %v181, %v306
        %v311 = vsel %vm310, -inf, %v286
        %v312 = vsel %vm236, %v311, -inf
        %313 = vmax.xlane.f32.xlu0 %v312
        %v314 = vpop.xlane.xlu0 %313
        %vm315 = vcmp.eq.f32.partialorder %v311, %v314
        %v316 = vsel %vm315, %v181, 16
        %v317 = vsel %vm236, %v316, 2147483647
        %v318 = vand.u32 %v317, 65535
        %v319 = vshra.s32 %v317, 16
        %v320 = vcvt.s32.f32 %v318
        %v321 = vcvt.s32.f32 %v319
        %322 = vmin.xlane.f32.xlu0 %v321
        %v323 = vpop.xlane.xlu0 %322
        %vm324 = vcmp.eq.f32.partialorder %v321, %v323
        %v325 = vsel %vm324, %v320, inf
        %326 = vmin.xlane.f32.xlu0 %v325
        %v327 = vpop.xlane.xlu0 %326
        %v328 = vcvt.f32.s32 %v327
        %v329 = vcvt.f32.s32 %v323
        %v330 = vshll.u32 %v329, 16
        %v331 = vadd.s32 %v330, %v328
        %vm332 = vcmp.eq.s32.totalorder %v181, 4
        %v333 = vsel %vm332, %v314, %v308
        %v334 = vsel %vm332, %v331, %v309
        %vm335 = vcmp.eq.s32.totalorder %v181, %v331
        %v336 = vsel %vm335, -inf, %v311
        %v337 = vsel %vm236, %v336, -inf
        %338 = vmax.xlane.f32.xlu0 %v337
        %v339 = vpop.xlane.xlu0 %338
        %vm340 = vcmp.eq.f32.partialorder %v336, %v339
        %v341 = vsel %vm340, %v181, 16
        %v342 = vsel %vm236, %v341, 2147483647
        %v343 = vand.u32 %v342, 65535
        %v344 = vshra.s32 %v342, 16
        %v345 = vcvt.s32.f32 %v343
        %v346 = vcvt.s32.f32 %v344
        %347 = vmin.xlane.f32.xlu0 %v346
        %v348 = vpop.xlane.xlu0 %347
        %vm349 = vcmp.eq.f32.partialorder %v346, %v348
        %v350 = vsel %vm349, %v345, inf
        %351 = vmin.xlane.f32.xlu0 %v350
        %v352 = vpop.xlane.xlu0 %351
        %v353 = vcvt.f32.s32 %v352
        %v354 = vcvt.f32.s32 %v348
        %v355 = vshll.u32 %v354, 16
        %v356 = vadd.s32 %v355, %v353
        %vm357 = vcmp.eq.s32.totalorder %v181, 5
        %v358 = vsel %vm357, %v339, %v333
        %v359 = vsel %vm357, %v356, %v334
        %vm360 = vcmp.eq.s32.totalorder %v181, %v356
        %v361 = vsel %vm360, -inf, %v336
        %v362 = vsel %vm236, %v361, -inf
        %363 = vmax.xlane.f32.xlu0 %v362
        %v364 = vpop.xlane.xlu0 %363
        %vm365 = vcmp.eq.f32.partialorder %v361, %v364
        %v366 = vsel %vm365, %v181, 16
        %v367 = vsel %vm236, %v366, 2147483647
        %v368 = vand.u32 %v367, 65535
        %v369 = vshra.s32 %v367, 16
        %v370 = vcvt.s32.f32 %v368
        %v371 = vcvt.s32.f32 %v369
        %372 = vmin.xlane.f32.xlu0 %v371
        %v373 = vpop.xlane.xlu0 %372
        %vm374 = vcmp.eq.f32.partialorder %v371, %v373
        %v375 = vsel %vm374, %v370, inf
        %376 = vmin.xlane.f32.xlu0 %v375
        %v377 = vpop.xlane.xlu0 %376
        %v378 = vcvt.f32.s32 %v377
        %v379 = vcvt.f32.s32 %v373
        %v380 = vshll.u32 %v379, 16
        %v381 = vadd.s32 %v380, %v378
        %vm382 = vcmp.eq.s32.totalorder %v181, 6
        %v383 = vsel %vm382, %v364, %v358
        %v384 = vsel %vm382, %v381, %v359
        %vm385 = vcmp.eq.s32.totalorder %v181, %v381
        %v386 = vsel %vm385, -inf, %v361
        %v387 = vsel %vm236, %v386, -inf
        %388 = vmax.xlane.f32.xlu0 %v387
        %v389 = vpop.xlane.xlu0 %388
        %vm390 = vcmp.eq.f32.partialorder %v386, %v389
        %v391 = vsel %vm390, %v181, 16
        %v392 = vsel %vm236, %v391, 2147483647
        %v393 = vand.u32 %v392, 65535
        %v394 = vshra.s32 %v392, 16
        %v395 = vcvt.s32.f32 %v393
        %v396 = vcvt.s32.f32 %v394
        %397 = vmin.xlane.f32.xlu0 %v396
        %v398 = vpop.xlane.xlu0 %397
        %vm399 = vcmp.eq.f32.partialorder %v396, %v398
        %v400 = vsel %vm399, %v395, inf
        %401 = vmin.xlane.f32.xlu0 %v400
        %v402 = vpop.xlane.xlu0 %401
        %v403 = vcvt.f32.s32 %v402
        %v404 = vcvt.f32.s32 %v398
        %v405 = vshll.u32 %v404, 16
        %v406 = vadd.s32 %v405, %v403
        %vm407 = vcmp.eq.s32.totalorder %v181, 7
        %v408 = vsel %vm407, %v389, %v383
        %v409 = vsel %vm407, %v406, %v384
        %v410 = vxor.u32 %v408, 2147483648
        %v411 = vmul.f32 %v410, 1.442695
        %v412 = vpow.pop %v411
        %v413 = vadd.f32 %v412, 1.0
        %v414 = vrcp.pop %v413
        %v415 = vmul.f32 1.0, %v414
        %v416 = vlaneseq
        %v417 = vshrl.u32 %v416, 7
        %v418 = vsub.s32 0, %v417
        %v419 = vrot.slane %v409, %v418
        %421 = vbcast.lane.b32.xlu0 %v419, 256
        %v422 = vpop.permute.xlu0 %421
        %vm423 = vcmp.eq.s32.totalorder %v181, %v422
        %v424 = vsel %vm423, 1, 0
        %v425 = vcvt.s32.f32 %v424
        %vm426 = vcmask 130048
        %v428 = vsel %vm426, %v425, 0
        %430 = vmatprep.subr.mxu0 0.0
        %431 = vmatpush1.msra.mxu0 %v162
        %432 = vmatprep.subr.mxu0 0.0
        %433 = vmatpush1.msra.mxu0 %v163
        %434 = vmatprep.subr.mxu0 0.0
        %435 = vmatpush1.msra.mxu0 0.0
        %436 = vmatprep.subr.mxu0 0.0
        %437 = vmatpush1.msra.mxu0 0.0
        %438 = vmatprep.subr.mxu0 0.0
        %439 = vmatpush1.msra.mxu0 0.0
        %440 = vmatprep.subr.mxu0 0.0
        %441 = vmatpush1.msra.mxu0 0.0
        %442 = vmatprep.subr.mxu0 0.0
        %443 = vmatpush1.msra.mxu0 0.0
        %444 = vmatprep.subr.mxu0 0.0
        %445 = vmatpush1.msra.mxu0 0.0
        %446 = vmatprep.subr.mxu0 0.0
        %447 = vmatpush1.msra.mxu0 0.0
        %448 = vmatprep.subr.mxu0 0.0
        %449 = vmatpush1.msra.mxu0 0.0
        %450 = vmatprep.subr.mxu0 0.0
        %451 = vmatpush1.msra.mxu0 0.0
        %452 = vmatprep.subr.mxu0 0.0
        %453 = vmatpush1.msra.mxu0 0.0
        %454 = vmatprep.subr.mxu0 0.0
        %455 = vmatpush1.msra.mxu0 0.0
        %456 = vmatprep.subr.mxu0 0.0
        %457 = vmatpush1.msra.mxu0 0.0
        %458 = vmatprep.subr.mxu0 0.0
        %459 = vmatpush1.msra.mxu0 0.0
        %460 = vmatprep.subr.mxu0 0.0
        %461 = vmatpush1.msra.mxu0 0.0
        %462 = vmatprep.subr.mxu0 0.0
        %463 = vmatpush1.msra.mxu0 0.0
        %464 = vmatprep.subr.mxu0 0.0
        %465 = vmatpush1.msra.mxu0 0.0
        %466 = vmatprep.subr.mxu0 0.0
        %467 = vmatpush1.msra.mxu0 0.0
        %468 = vmatprep.subr.mxu0 0.0
        %469 = vmatpush1.msra.mxu0 0.0
        %470 = vmatprep.subr.mxu0 0.0
        %471 = vmatpush1.msra.mxu0 0.0
        %472 = vmatprep.subr.mxu0 0.0
        %473 = vmatpush1.msra.mxu0 0.0
        %474 = vmatprep.subr.mxu0 0.0
        %475 = vmatpush1.msra.mxu0 0.0
        %476 = vmatprep.subr.mxu0 0.0
        %477 = vmatpush1.msra.mxu0 0.0
        %478 = vmatprep.subr.mxu0 0.0
        %479 = vmatpush1.msra.mxu0 0.0
        %480 = vmatprep.subr.mxu0 0.0
        %481 = vmatpush1.msra.mxu0 0.0
        %482 = vmatprep.subr.mxu0 0.0
        %483 = vmatpush1.msra.mxu0 0.0
        %484 = vmatprep.subr.mxu0 0.0
        %485 = vmatpush1.msra.mxu0 0.0
        %486 = vmatprep.subr.mxu0 0.0
        %487 = vmatpush1.msra.mxu0 0.0
        %488 = vmatprep.subr.mxu0 0.0
        %489 = vmatpush1.msra.mxu0 0.0
        %490 = vmatprep.subr.mxu0 0.0
        %491 = vmatpush1.msra.mxu0 0.0
        %492 = vmatprep.subr.mxu0 0.0
        %493 = vmatpush1.msra.mxu0 0.0
        %494 = vmatprep.mubr.f32.mxu0 0.0
        %495 = vmatmul.mubr.f32.gmra.mrb[0].mxu0 %v428
        %v496 = vpop.f32.mrb[0].mxu0
        %v497 = vadd.f32 0.0, %v496
        %v498 = vpop.f32.mrb[0].mxu0
        %499 = vdwg.mxu0
        %v500 = vlaneseq
        %v501 = vshrl.u32 %v500, 7
        %v502 = vsub.s32 0, %v501
        %v503 = vrot.slane %v415, %v502
        %505 = vbcast.lane.b32.xlu0 %v503, 256
        %v506 = vpop.permute.xlu0 %505
        %v507 = vmul.f32 %v497, %v506
        %508 = vst.msk [vmem:[%s161] sm:$0xff] %vm173, %v507
        %s509 = sand.u32 %s74, 1
        %s510 = scalar_lea.sflag [#allocation4], %s509
        %s511 = sand.u32 %s74, 1
        %s512 = smul.addr %s511, 8
        %s513 = scalar_lea.vmem [#allocation5], %s512
        // Predicated region
        $region33: #{tpu_custom_call.1} parent=27 // pred_check
          %p514 = pneg %p84
        $region34: #{tpu_custom_call.1} parent=27 // pred_check_branch
          %516 = sbr.rel (%p514) target = $region36
        $region35: #{tpu_custom_call.1} parent=27 // pred_region
          %s518 = ssub.s32 128, 128
          %519 = vsyncadd %s510, %s518
          %s520 = smul.addr %s19, 128
          %s521 = scalar_lea.hbm %s2, %s520
          %s523 = sshll.u32 %s513, 4
          %s524 = int_to_ptr.vmem [resolvable:$true] %s523
          %526 = dma.vmem_to_hbm [thread:$0]  %s524, 128, %s521, %s510
        $region36: #{tpu_custom_call.1} parent=27 // pred_fallthru
          _
      $region28: #{tpu_custom_call.1} parent=5 // pred_fallthru
        _
      %p527 = scmp.le.s32.totalorder 2, %s14
      // Predicated region
      $region37: #{tpu_custom_call.1} parent=5 // pred_check
        %p528 = pneg %p527
      $region38: #{tpu_custom_call.1} parent=5 // pred_check_branch
        %530 = sbr.rel (%p528) target = $region40
      $region39: #{tpu_custom_call.1} parent=5 // pred_region
        %s531 = ssub.s32 %s14, 2
        // Predicated region
        $region41: #{tpu_custom_call.1} parent=39 // pred_check
          %p532 = pneg %p90
        $region42: #{tpu_custom_call.1} parent=39 // pred_check_branch
          %534 = sbr.rel (%p532) target = $region44
        $region43: #{tpu_custom_call.1} parent=39 // pred_region
          %s535 = sand.u32 %s75, 1
          %s536 = scalar_lea.sflag [#allocation4], %s535
          %s537 = sand.u32 %s75, 1
          %s538 = smul.addr %s537, 8
          %s539 = scalar_lea.vmem [#allocation5], %s538
          %540 = dma.done %s536, 128
        $region44: #{tpu_custom_call.1} parent=39 // pred_fallthru
          _
      $region40: #{tpu_custom_call.1} parent=5 // pred_fallthru
        _
    $region6: #{tpu_custom_call.1} parent=1 // loop_footer
      %s18 = sadd.s32 1, %s14
    $region7: #{tpu_custom_call.1} parent=1 // loop_footer_branch
      %13 = sbr.rel target = $region3
    $region8: #{tpu_custom_call.1} parent=1 // loop_exit
      _
    %541 = vsyncpa [#allocation3], 1
    %s542 = scalar_lea.sflag [#allocation3], 1
    %543 = vsyncpa %s542, 1
    %544 = vsyncpa [#allocation4], 1
    %s545 = scalar_lea.sflag [#allocation4], 1
    %546 = vsyncpa %s545, 1

</llo_original>
